<compile_context>
chip_gen: v6e
topology: v6e:2x2x1
jax: 0.10.0
libtpu: 0.0.40
codegen_flags: <defaults>
</compile_context>

<pallas_src>
import functools
import math

import jax
import jax.numpy as jnp
from jax import lax
from jax.experimental import pallas as pl
from jax.experimental.pallas import tpu as pltpu


def _round_up(n, m):
    return ((n + m - 1) // m) * m


def _encoder_kernel(n_lrelu, h_dim_true, *refs):
    """refs = (x, eps, w_0, b_0, ..., w_{n-1}, b_{n-1}, w_head, b_head, out).

    Feature axes zero-padded to multiples of 128.  Padded lanes of t stay exactly zero
    (zero weight columns + zero bias), so LayerNorm's mean needs no mask; one masked `d`
    keeps the two-pass variance exact over the true h_dim lanes."""
    x_ref, eps_ref = refs[0], refs[1]
    out_ref = refs[-1]
    param_refs = refs[2:-1]

    h_pad = param_refs[0].shape[1]                       # padded hidden width
    padded_h = h_dim_true != h_pad
    if padded_h:
        lane = lax.broadcasted_iota(jnp.int32, (1, h_pad), 1)
        lane_mask = lane < h_dim_true                    # True on real hidden lanes
    inv_h = 1.0 / float(h_dim_true)
    c0 = 0.7978845608028654                              # sqrt(2/pi)
    c1 = 0.044715

    h = x_ref[...]                                       # bf16 tile, zero in padded lanes
    for i in range(n_lrelu):
        w = param_refs[2 * i][...]                       # bf16 (in_pad, h_pad)
        b = param_refs[2 * i + 1][...]                   # f32  (1, h_pad)
        # Linear: bf16 operands, f32 accumulation on the MXU.
        t = jnp.dot(h.astype(jnp.bfloat16), w,
                    preferred_element_type=jnp.float32) + b
        # LayerNorm(elementwise_affine=False): padded lanes of t are exactly 0, so the
        # unmasked sum equals the sum over the true h_dim lanes.
        mu = jnp.sum(t, axis=-1, keepdims=True) * inv_h
        if padded_h:
            d = jnp.where(lane_mask, t - mu, 0.0)        # single select per layer
        else:
            d = t - mu                                   # static fast path: no masking at all
        var = jnp.sum(d * d, axis=-1, keepdims=True) * inv_h
        hn = d * lax.rsqrt(var + 1e-5)                   # PyTorch LayerNorm eps
        # GELU, tanh approximation: 0.5*x*(1+tanh(sqrt(2/pi)*(x+0.044715*x^3))).
        # tanh executes on the EUP slot; ~3e-3 max abs deviation from exact erf GELU.
        h = 0.5 * hn * (1.0 + jnp.tanh(c0 * (hn + c1 * hn * hn * hn)))

    # Fused head: [h2mu | h2logvar] as one matmul.
    w_head = param_refs[2 * n_lrelu][...]                # bf16 (h_pad, 2*z_pad)
    b_head = param_refs[2 * n_lrelu + 1][...]            # f32  (1, 2*z_pad)
    head = jnp.dot(h.astype(jnp.bfloat16), w_head,
                   preferred_element_type=jnp.float32) + b_head

    z_pad = eps_ref.shape[-1]
    mu_z = head[:, :z_pad]
    logvar = head[:, z_pad:]
    sigma = jnp.logaddexp(logvar, 0.0)                   # numerically stable softplus
    z = mu_z + sigma * eps_ref[...]                      # reparameterized rsample

    # Packed lane-dense output: [ z | mu | sigma ], all 128-aligned slices.
    out_ref[:, :z_pad] = z
    out_ref[:, z_pad:2 * z_pad] = mu_z
    out_ref[:, 2 * z_pad:] = sigma


def encoder_forward(x, eps, params, norm_input=False):
    """x: (batch, x_dim) f32, eps: (batch, z_dim) f32 standard normal.
    params: [(w, b)] pairs with w (in, out), b (1, out); the first num_h_layers pairs
    are LinearReLU layers, the last two are h2mu and h2logvar.
    Returns (z, mu, sigma)."""
    if norm_input:
        # Matches the PyTorch norm_input branch (cheap JAX-side preprocessing).
        x_mean = jnp.mean(x, axis=-1, keepdims=True)
        x = jnp.concatenate([x / x_mean, x_mean], axis=-1)

    n_lrelu = len(params) - 2
    batch, x_dim = x.shape
    h_dim = params[0][0].shape[1]
    z_dim = params[-1][0].shape[1]

    # Lane-dense padded widths.
    x_pad = _round_up(x_dim, 128)
    h_pad = _round_up(h_dim, 128)
    z_pad = _round_up(z_dim, 128)

    def pad2(a, rows, cols):
        return jnp.pad(a, ((0, rows - a.shape[0]), (0, cols - a.shape[1])))

    # Padded parameters: weights bf16 (f32 accumulation in kernel), biases f32.
    flat = []
    in_pads = [x_pad] + [h_pad] * (n_lrelu - 1)
    for i in range(n_lrelu):
        w, b = params[i]
        flat.append(pad2(w, in_pads[i], h_pad).astype(jnp.bfloat16))
        flat.append(pad2(b, 1, h_pad).astype(jnp.float32))
    (w_mu, b_mu), (w_lv, b_lv) = params[-2], params[-1]
    w_head = jnp.concatenate(
        [pad2(w_mu, h_pad, z_pad), pad2(w_lv, h_pad, z_pad)], axis=1
    ).astype(jnp.bfloat16)
    b_head = jnp.concatenate(
        [pad2(b_mu, 1, z_pad), pad2(b_lv, 1, z_pad)], axis=1
    ).astype(jnp.float32)
    flat += [w_head, b_head]
    param_bytes = sum(int(a.size) * a.dtype.itemsize for a in flat)

    # VMEM capacity (v5e/v6e: 128 MiB, v7x: 64 MiB per core); conservative fallback.
    try:
        vmem_cap = int(pltpu.get_tpu_info().vmem_capacity_bytes)
    except Exception:
        vmem_cap = 64 << 20

    def vmem_need(tb):
        # Double-buffered per-tile I/O (bf16 x, f32 eps, packed f32 output)
        io = 2 * (tb * x_pad * 2 + tb * z_pad * 4 + tb * 3 * z_pad * 4)
        # Live f32 activations (t/d/hn/h) + bf16 matmul operand copy.
        act = 4 * tb * h_pad * 4 + tb * h_pad * 2
        # Params counted twice (assume double-buffered by the pipeline) + headroom.
        return 2 * param_bytes + io + act + (8 << 20)

    # Large batch tiles amortize per-grid-step overhead; shrink only if VMEM-bound.
    tile_b = min(512, _round_up(batch, 8))
    while tile_b > 8 and vmem_need(tile_b) > int(0.9 * vmem_cap):
        tile_b = max(8, _round_up(tile_b // 2, 8))

    batch_pad = _round_up(batch, tile_b)
    grid = (batch_pad // tile_b,)

    # Inputs: x as bf16 (kernel feeds bf16 to the MXU anyway), eps stays f32.
    xp = pad2(x, batch_pad, x_pad).astype(jnp.bfloat16)
    epsp = pad2(eps.astype(jnp.float32), batch_pad, z_pad)

    in_specs = [
        pl.BlockSpec((tile_b, x_pad), lambda i: (i, 0)),   # x tile (pipelined over batch)
        pl.BlockSpec((tile_b, z_pad), lambda i: (i, 0)),   # eps tile
    ]
    for a in flat:
        # Full-array weight/bias blocks, constant index -> stay VMEM-resident across tiles.
        in_specs.append(pl.BlockSpec(a.shape, lambda i: (0, 0)))

    out_specs = pl.BlockSpec((tile_b, 3 * z_pad), lambda i: (i, 0))
    out_shape = jax.ShapeDtypeStruct((batch_pad, 3 * z_pad), jnp.float32)

    vmem_limit = int(min(max(vmem_need(tile_b), 32 << 20), int(0.9 * vmem_cap)))

    kernel = functools.partial(_encoder_kernel, n_lrelu, h_dim)
    out_p = pl.pallas_call(
        kernel,
        out_shape=out_shape,
        grid=grid,
        in_specs=in_specs,
        out_specs=out_specs,
        compiler_params=pltpu.CompilerParams(
            dimension_semantics=("parallel",),
            vmem_limit_bytes=vmem_limit,
        ),
    )(xp, epsp, *flat)

    # Unpack [ z | mu | sigma ] and strip batch/lane padding.
    z = out_p[:batch, :z_dim]
    mu = out_p[:batch, z_pad:z_pad + z_dim]
    sigma = out_p[:batch, 2 * z_pad:2 * z_pad + z_dim]
    return z, mu, sigma


def encoder_reference(x, eps, params):
    """Pure-JAX f32 reference of the Encoder forward (exact erf GELU), for checking."""
    h = x
    for (w, b) in params[:-2]:
        t = h @ w + b
        mu = jnp.mean(t, axis=-1, keepdims=True)
        var = jnp.mean((t - mu) ** 2, axis=-1, keepdims=True)
        hn = (t - mu) * lax.rsqrt(var + 1e-5)
        h = 0.5 * hn * (1.0 + lax.erf(hn / math.sqrt(2.0)))
    (w_mu, b_mu), (w_lv, b_lv) = params[-2], params[-1]
    mu_z = h @ w_mu + b_mu
    logvar = h @ w_lv + b_lv
    sigma = jnp.logaddexp(logvar, 0.0)
    return mu_z + sigma * eps, mu_z, sigma


def init_encoder_params(key, num_h_layers, x_dim, h_dim, z_dim):
    """Deterministic synthetic parameters (shapes match the PyTorch module, norm_input=False)."""
    dims = ([(x_dim, h_dim)] + [(h_dim, h_dim)] * (num_h_layers - 1)
            + [(h_dim, z_dim), (h_dim, z_dim)])          # ... , h2mu, h2logvar
    params = []
    for (din, dout) in dims:
        key, kw, kb = jax.random.split(key, 3)
        bound = 1.0 / math.sqrt(din)
        w = jax.random.uniform(kw, (din, dout), jnp.float32, -bound, bound)
        b = jax.random.uniform(kb, (1, dout), jnp.float32, -bound, bound)
        params.append((w, b))
    return params


if __name__ == "__main__":
    num_h_layers = 3
    x_dim, h_dim, z_dim = 16, 32, 8
    batch = 8

    key = jax.random.PRNGKey(0)
    key, kx, ke = jax.random.split(key, 3)
    x = jax.random.normal(kx, (batch, x_dim), jnp.float32)
    eps = jax.random.normal(ke, (batch, z_dim), jnp.float32)   # rsample noise

    params = init_encoder_params(key, num_h_layers, x_dim, h_dim, z_dim)

    z, mu, sigma = encoder_forward(x, eps, params, norm_input=False)
    z, mu, sigma = jax.block_until_ready((z, mu, sigma))

    z_ref, mu_ref, sig_ref = encoder_reference(x, eps, params)

    assert z.shape == (batch, z_dim)
    assert mu.shape == (batch, z_dim)
    assert sigma.shape == (batch, z_dim)
    assert bool(jnp.all(jnp.isfinite(z)))
    assert bool(jnp.all(sigma > 0))
    # bf16 matmul inputs + tanh-approx GELU -> small deviation vs exact f32 reference.
    assert bool(jnp.allclose(mu, mu_ref, atol=5e-2, rtol=5e-2))
    assert bool(jnp.allclose(sigma, sig_ref, atol=5e-2, rtol=5e-2))
    assert bool(jnp.allclose(z, z_ref, atol=5e-2, rtol=5e-2))

    print("KERNEL_OK")
</pallas_src>

<mosaic_0001>
module attributes {stable_mosaic.version = 11 : i64} {
  func.func @_encoder_kernel(%arg0: i32, %arg1: memref<8x128xbf16, #tpu.memory_space<vmem>>, %arg2: memref<8x128xf32, #tpu.memory_space<vmem>>, %arg3: memref<128x128xbf16, #tpu.memory_space<vmem>>, %arg4: memref<1x128xf32, #tpu.memory_space<vmem>>, %arg5: memref<128x128xbf16, #tpu.memory_space<vmem>>, %arg6: memref<1x128xf32, #tpu.memory_space<vmem>>, %arg7: memref<128x128xbf16, #tpu.memory_space<vmem>>, %arg8: memref<1x128xf32, #tpu.memory_space<vmem>>, %arg9: memref<128x256xbf16, #tpu.memory_space<vmem>>, %arg10: memref<1x256xf32, #tpu.memory_space<vmem>>, %arg11: memref<8x384xf32, #tpu.memory_space<vmem>>) attributes {dimension_semantics = [#tpu.dimension_semantics<parallel>], iteration_bounds = array<i64: 1>, scalar_prefetch = 0 : i64, scratch_operands = 0 : i64, tpu.core_type = #tpu.core_type<tc>, window_params = [{transform_indices = @transform_0, window_bounds = array<i64: 8, 128>}, {transform_indices = @transform_1, window_bounds = array<i64: 8, 128>}, {pipeline_mode = #tpu.pipeline_mode<synchronous>, transform_indices = @transform_2, window_bounds = array<i64: 128, 128>}, {pipeline_mode = #tpu.pipeline_mode<synchronous>, transform_indices = @transform_3, window_bounds = array<i64: 1, 128>}, {pipeline_mode = #tpu.pipeline_mode<synchronous>, transform_indices = @transform_4, window_bounds = array<i64: 128, 128>}, {pipeline_mode = #tpu.pipeline_mode<synchronous>, transform_indices = @transform_5, window_bounds = array<i64: 1, 128>}, {pipeline_mode = #tpu.pipeline_mode<synchronous>, transform_indices = @transform_6, window_bounds = array<i64: 128, 128>}, {pipeline_mode = #tpu.pipeline_mode<synchronous>, transform_indices = @transform_7, window_bounds = array<i64: 1, 128>}, {pipeline_mode = #tpu.pipeline_mode<synchronous>, transform_indices = @transform_8, window_bounds = array<i64: 128, 256>}, {pipeline_mode = #tpu.pipeline_mode<synchronous>, transform_indices = @transform_9, window_bounds = array<i64: 1, 256>}, {transform_indices = @transform_10, window_bounds = array<i64: 8, 384>}]} {
    %0 = tpu.iota {dimensions = array<i32: 1>} : vector<1x128xi32>
    %c32_i32 = arith.constant 32 : i32
    %1 = vector.broadcast %c32_i32 : i32 to vector<1x128xi32>
    %2 = arith.cmpi slt, %0, %1 : vector<1x128xi32>
    %c0 = arith.constant 0 : index
    %c0_0 = arith.constant 0 : index
    %3 = vector.load %arg1[%c0, %c0_0] : memref<8x128xbf16, #tpu.memory_space<vmem>>, vector<8x128xbf16>
    %c0_1 = arith.constant 0 : index
    %c0_2 = arith.constant 0 : index
    %4 = vector.load %arg3[%c0_1, %c0_2] : memref<128x128xbf16, #tpu.memory_space<vmem>>, vector<128x128xbf16>
    %c0_3 = arith.constant 0 : index
    %c0_4 = arith.constant 0 : index
    %5 = vector.load %arg4[%c0_3, %c0_4] : memref<1x128xf32, #tpu.memory_space<vmem>>, vector<1x128xf32>
    %cst = arith.constant dense<0.000000e+00> : vector<8x128xf32>
    %6 = tpu.matmul %3, %4, %cst {dimension_numbers = #tpu.dot_dimension_numbers<[1], [0], [0], [1], [0, 0, 1, 1], [], []>} : vector<8x128xbf16>, vector<128x128xbf16>, vector<8x128xf32> -> vector<8x128xf32>
    %7 = vector.broadcast %5 : vector<1x128xf32> to vector<8x128xf32>
    %8 = arith.addf %6, %7 : vector<8x128xf32>
    %cst_5 = arith.constant dense<0.000000e+00> : vector<8xf32>
    %9 = vector.multi_reduction <add>, %8, %cst_5 [1] : vector<8x128xf32> to vector<8xf32>
    %10 = vector.shape_cast %9 : vector<8xf32> to vector<8x1xf32>
    %cst_6 = arith.constant 3.125000e-02 : f32
    %11 = vector.broadcast %cst_6 : f32 to vector<8x1xf32>
    %12 = arith.mulf %10, %11 : vector<8x1xf32>
    %13 = vector.broadcast %12 : vector<8x1xf32> to vector<8x128xf32>
    %14 = arith.subf %8, %13 : vector<8x128xf32>
    %cst_7 = arith.constant 0.000000e+00 : f32
    %15 = vector.shape_cast %2 : vector<1x128xi1> to vector<1x128xi1>
    %16 = vector.broadcast %15 : vector<1x128xi1> to vector<8x128xi1>
    %17 = vector.broadcast %cst_7 : f32 to vector<8x128xf32>
    %18 = arith.select %16, %14, %17 : vector<8x128xi1>, vector<8x128xf32>
    %19 = arith.mulf %18, %18 : vector<8x128xf32>
    %cst_8 = arith.constant dense<0.000000e+00> : vector<8xf32>
    %20 = vector.multi_reduction <add>, %19, %cst_8 [1] : vector<8x128xf32> to vector<8xf32>
    %21 = vector.shape_cast %20 : vector<8xf32> to vector<8x1xf32>
    %cst_9 = arith.constant 3.125000e-02 : f32
    %22 = vector.broadcast %cst_9 : f32 to vector<8x1xf32>
    %23 = arith.mulf %21, %22 : vector<8x1xf32>
    %cst_10 = arith.constant 9.99999974E-6 : f32
    %24 = vector.broadcast %cst_10 : f32 to vector<8x1xf32>
    %25 = arith.addf %23, %24 : vector<8x1xf32>
    %26 = math.rsqrt %25 : vector<8x1xf32>
    %27 = vector.broadcast %26 : vector<8x1xf32> to vector<8x128xf32>
    %28 = arith.mulf %18, %27 : vector<8x128xf32>
    %cst_11 = arith.constant 5.000000e-01 : f32
    %29 = vector.broadcast %cst_11 : f32 to vector<8x128xf32>
    %30 = arith.mulf %29, %28 : vector<8x128xf32>
    %cst_12 = arith.constant 4.471500e-02 : f32
    %31 = vector.broadcast %cst_12 : f32 to vector<8x128xf32>
    %32 = arith.mulf %31, %28 : vector<8x128xf32>
    %33 = arith.mulf %32, %28 : vector<8x128xf32>
    %34 = arith.mulf %33, %28 : vector<8x128xf32>
    %35 = arith.addf %28, %34 : vector<8x128xf32>
    %cst_13 = arith.constant 0.797884583 : f32
    %36 = vector.broadcast %cst_13 : f32 to vector<8x128xf32>
    %37 = arith.mulf %36, %35 : vector<8x128xf32>
    %38 = math.tanh %37 : vector<8x128xf32>
    %cst_14 = arith.constant 1.000000e+00 : f32
    %39 = vector.broadcast %cst_14 : f32 to vector<8x128xf32>
    %40 = arith.addf %39, %38 : vector<8x128xf32>
    %41 = arith.mulf %30, %40 : vector<8x128xf32>
    %c0_15 = arith.constant 0 : index
    %c0_16 = arith.constant 0 : index
    %42 = vector.load %arg5[%c0_15, %c0_16] : memref<128x128xbf16, #tpu.memory_space<vmem>>, vector<128x128xbf16>
    %c0_17 = arith.constant 0 : index
    %c0_18 = arith.constant 0 : index
    %43 = vector.load %arg6[%c0_17, %c0_18] : memref<1x128xf32, #tpu.memory_space<vmem>>, vector<1x128xf32>
    %44 = arith.truncf %41 : vector<8x128xf32> to vector<8x128xbf16>
    %cst_19 = arith.constant dense<0.000000e+00> : vector<8x128xf32>
    %45 = tpu.matmul %44, %42, %cst_19 {dimension_numbers = #tpu.dot_dimension_numbers<[1], [0], [0], [1], [0, 0, 1, 1], [], []>} : vector<8x128xbf16>, vector<128x128xbf16>, vector<8x128xf32> -> vector<8x128xf32>
    %46 = vector.broadcast %43 : vector<1x128xf32> to vector<8x128xf32>
    %47 = arith.addf %45, %46 : vector<8x128xf32>
    %cst_20 = arith.constant dense<0.000000e+00> : vector<8xf32>
    %48 = vector.multi_reduction <add>, %47, %cst_20 [1] : vector<8x128xf32> to vector<8xf32>
    %49 = vector.shape_cast %48 : vector<8xf32> to vector<8x1xf32>
    %cst_21 = arith.constant 3.125000e-02 : f32
    %50 = vector.broadcast %cst_21 : f32 to vector<8x1xf32>
    %51 = arith.mulf %49, %50 : vector<8x1xf32>
    %52 = vector.broadcast %51 : vector<8x1xf32> to vector<8x128xf32>
    %53 = arith.subf %47, %52 : vector<8x128xf32>
    %cst_22 = arith.constant 0.000000e+00 : f32
    %54 = vector.shape_cast %2 : vector<1x128xi1> to vector<1x128xi1>
    %55 = vector.broadcast %54 : vector<1x128xi1> to vector<8x128xi1>
    %56 = vector.broadcast %cst_22 : f32 to vector<8x128xf32>
    %57 = arith.select %55, %53, %56 : vector<8x128xi1>, vector<8x128xf32>
    %58 = arith.mulf %57, %57 : vector<8x128xf32>
    %cst_23 = arith.constant dense<0.000000e+00> : vector<8xf32>
    %59 = vector.multi_reduction <add>, %58, %cst_23 [1] : vector<8x128xf32> to vector<8xf32>
    %60 = vector.shape_cast %59 : vector<8xf32> to vector<8x1xf32>
    %cst_24 = arith.constant 3.125000e-02 : f32
    %61 = vector.broadcast %cst_24 : f32 to vector<8x1xf32>
    %62 = arith.mulf %60, %61 : vector<8x1xf32>
    %cst_25 = arith.constant 9.99999974E-6 : f32
    %63 = vector.broadcast %cst_25 : f32 to vector<8x1xf32>
    %64 = arith.addf %62, %63 : vector<8x1xf32>
    %65 = math.rsqrt %64 : vector<8x1xf32>
    %66 = vector.broadcast %65 : vector<8x1xf32> to vector<8x128xf32>
    %67 = arith.mulf %57, %66 : vector<8x128xf32>
    %cst_26 = arith.constant 5.000000e-01 : f32
    %68 = vector.broadcast %cst_26 : f32 to vector<8x128xf32>
    %69 = arith.mulf %68, %67 : vector<8x128xf32>
    %cst_27 = arith.constant 4.471500e-02 : f32
    %70 = vector.broadcast %cst_27 : f32 to vector<8x128xf32>
    %71 = arith.mulf %70, %67 : vector<8x128xf32>
    %72 = arith.mulf %71, %67 : vector<8x128xf32>
    %73 = arith.mulf %72, %67 : vector<8x128xf32>
    %74 = arith.addf %67, %73 : vector<8x128xf32>
    %cst_28 = arith.constant 0.797884583 : f32
    %75 = vector.broadcast %cst_28 : f32 to vector<8x128xf32>
    %76 = arith.mulf %75, %74 : vector<8x128xf32>
    %77 = math.tanh %76 : vector<8x128xf32>
    %cst_29 = arith.constant 1.000000e+00 : f32
    %78 = vector.broadcast %cst_29 : f32 to vector<8x128xf32>
    %79 = arith.addf %78, %77 : vector<8x128xf32>
    %80 = arith.mulf %69, %79 : vector<8x128xf32>
    %c0_30 = arith.constant 0 : index
    %c0_31 = arith.constant 0 : index
    %81 = vector.load %arg7[%c0_30, %c0_31] : memref<128x128xbf16, #tpu.memory_space<vmem>>, vector<128x128xbf16>
    %c0_32 = arith.constant 0 : index
    %c0_33 = arith.constant 0 : index
    %82 = vector.load %arg8[%c0_32, %c0_33] : memref<1x128xf32, #tpu.memory_space<vmem>>, vector<1x128xf32>
    %83 = arith.truncf %80 : vector<8x128xf32> to vector<8x128xbf16>
    %cst_34 = arith.constant dense<0.000000e+00> : vector<8x128xf32>
    %84 = tpu.matmul %83, %81, %cst_34 {dimension_numbers = #tpu.dot_dimension_numbers<[1], [0], [0], [1], [0, 0, 1, 1], [], []>} : vector<8x128xbf16>, vector<128x128xbf16>, vector<8x128xf32> -> vector<8x128xf32>
    %85 = vector.broadcast %82 : vector<1x128xf32> to vector<8x128xf32>
    %86 = arith.addf %84, %85 : vector<8x128xf32>
    %cst_35 = arith.constant dense<0.000000e+00> : vector<8xf32>
    %87 = vector.multi_reduction <add>, %86, %cst_35 [1] : vector<8x128xf32> to vector<8xf32>
    %88 = vector.shape_cast %87 : vector<8xf32> to vector<8x1xf32>
    %cst_36 = arith.constant 3.125000e-02 : f32
    %89 = vector.broadcast %cst_36 : f32 to vector<8x1xf32>
    %90 = arith.mulf %88, %89 : vector<8x1xf32>
    %91 = vector.broadcast %90 : vector<8x1xf32> to vector<8x128xf32>
    %92 = arith.subf %86, %91 : vector<8x128xf32>
    %cst_37 = arith.constant 0.000000e+00 : f32
    %93 = vector.shape_cast %2 : vector<1x128xi1> to vector<1x128xi1>
    %94 = vector.broadcast %93 : vector<1x128xi1> to vector<8x128xi1>
    %95 = vector.broadcast %cst_37 : f32 to vector<8x128xf32>
    %96 = arith.select %94, %92, %95 : vector<8x128xi1>, vector<8x128xf32>
    %97 = arith.mulf %96, %96 : vector<8x128xf32>
    %cst_38 = arith.constant dense<0.000000e+00> : vector<8xf32>
    %98 = vector.multi_reduction <add>, %97, %cst_38 [1] : vector<8x128xf32> to vector<8xf32>
    %99 = vector.shape_cast %98 : vector<8xf32> to vector<8x1xf32>
    %cst_39 = arith.constant 3.125000e-02 : f32
    %100 = vector.broadcast %cst_39 : f32 to vector<8x1xf32>
    %101 = arith.mulf %99, %100 : vector<8x1xf32>
    %cst_40 = arith.constant 9.99999974E-6 : f32
    %102 = vector.broadcast %cst_40 : f32 to vector<8x1xf32>
    %103 = arith.addf %101, %102 : vector<8x1xf32>
    %104 = math.rsqrt %103 : vector<8x1xf32>
    %105 = vector.broadcast %104 : vector<8x1xf32> to vector<8x128xf32>
    %106 = arith.mulf %96, %105 : vector<8x128xf32>
    %cst_41 = arith.constant 5.000000e-01 : f32
    %107 = vector.broadcast %cst_41 : f32 to vector<8x128xf32>
    %108 = arith.mulf %107, %106 : vector<8x128xf32>
    %cst_42 = arith.constant 4.471500e-02 : f32
    %109 = vector.broadcast %cst_42 : f32 to vector<8x128xf32>
    %110 = arith.mulf %109, %106 : vector<8x128xf32>
    %111 = arith.mulf %110, %106 : vector<8x128xf32>
    %112 = arith.mulf %111, %106 : vector<8x128xf32>
    %113 = arith.addf %106, %112 : vector<8x128xf32>
    %cst_43 = arith.constant 0.797884583 : f32
    %114 = vector.broadcast %cst_43 : f32 to vector<8x128xf32>
    %115 = arith.mulf %114, %113 : vector<8x128xf32>
    %116 = math.tanh %115 : vector<8x128xf32>
    %cst_44 = arith.constant 1.000000e+00 : f32
    %117 = vector.broadcast %cst_44 : f32 to vector<8x128xf32>
    %118 = arith.addf %117, %116 : vector<8x128xf32>
    %119 = arith.mulf %108, %118 : vector<8x128xf32>
    %c0_45 = arith.constant 0 : index
    %c0_46 = arith.constant 0 : index
    %120 = vector.load %arg9[%c0_45, %c0_46] : memref<128x256xbf16, #tpu.memory_space<vmem>>, vector<128x256xbf16>
    %c0_47 = arith.constant 0 : index
    %c0_48 = arith.constant 0 : index
    %121 = vector.load %arg10[%c0_47, %c0_48] : memref<1x256xf32, #tpu.memory_space<vmem>>, vector<1x256xf32>
    %122 = arith.truncf %119 : vector<8x128xf32> to vector<8x128xbf16>
    %cst_49 = arith.constant dense<0.000000e+00> : vector<8x256xf32>
    %123 = tpu.matmul %122, %120, %cst_49 {dimension_numbers = #tpu.dot_dimension_numbers<[1], [0], [0], [1], [0, 0, 1, 1], [], []>} : vector<8x128xbf16>, vector<128x256xbf16>, vector<8x256xf32> -> vector<8x256xf32>
    %124 = vector.broadcast %121 : vector<1x256xf32> to vector<8x256xf32>
    %125 = arith.addf %123, %124 : vector<8x256xf32>
    %126 = vector.extract_strided_slice %125 {offsets = [0, 0], sizes = [8, 128], strides = [1, 1]} : vector<8x256xf32> to vector<8x128xf32>
    %127 = vector.extract_strided_slice %125 {offsets = [0, 128], sizes = [8, 128], strides = [1, 1]} : vector<8x256xf32> to vector<8x128xf32>
    %cst_50 = arith.constant 0.000000e+00 : f32
    %128 = vector.broadcast %cst_50 : f32 to vector<8x128xf32>
    %129 = arith.maximumf %127, %128 : vector<8x128xf32>
    %130 = vector.broadcast %cst_50 : f32 to vector<8x128xf32>
    %131 = arith.subf %127, %130 : vector<8x128xf32>
    %132 = arith.cmpf one, %131, %131 : vector<8x128xf32>
    %133 = vector.broadcast %cst_50 : f32 to vector<8x128xf32>
    %134 = arith.addf %127, %133 : vector<8x128xf32>
    %135 = math.absf %131 : vector<8x128xf32>
    %cst_51 = arith.constant 0.000000e+00 : f32
    %136 = vector.broadcast %cst_51 : f32 to vector<8x128xf32>
    %137 = arith.subf %136, %135 : vector<8x128xf32>
    %138 = math.exp %137 : vector<8x128xf32>
    %139 = math.log1p %138 : vector<8x128xf32>
    %140 = arith.addf %129, %139 : vector<8x128xf32>
    %141 = arith.select %132, %134, %140 : vector<8x128xi1>, vector<8x128xf32>
    %c0_52 = arith.constant 0 : index
    %c0_53 = arith.constant 0 : index
    %142 = vector.load %arg2[%c0_52, %c0_53] : memref<8x128xf32, #tpu.memory_space<vmem>>, vector<8x128xf32>
    %143 = arith.mulf %141, %142 : vector<8x128xf32>
    %144 = arith.addf %126, %143 : vector<8x128xf32>
    %c0_54 = arith.constant 0 : index
    %c0_55 = arith.constant 0 : index
    %145 = vector.load %arg11[%c0_54, %c0_55] : memref<8x384xf32, #tpu.memory_space<vmem>>, vector<8x128xf32>
    tpu.vector_store %arg11[%c0_54, %c0_55], %144 {strides = array<i32>} : memref<8x384xf32, #tpu.memory_space<vmem>>, vector<8x128xf32>,
    %c0_56 = arith.constant 0 : index
    %c128 = arith.constant 128 : index
    %146 = vector.load %arg11[%c0_56, %c128] : memref<8x384xf32, #tpu.memory_space<vmem>>, vector<8x128xf32>
    tpu.vector_store %arg11[%c0_56, %c128], %126 {strides = array<i32>} : memref<8x384xf32, #tpu.memory_space<vmem>>, vector<8x128xf32>,
    %c0_57 = arith.constant 0 : index
    %c256 = arith.constant 256 : index
    %147 = vector.load %arg11[%c0_57, %c256] : memref<8x384xf32, #tpu.memory_space<vmem>>, vector<8x128xf32>
    tpu.vector_store %arg11[%c0_57, %c256], %141 {strides = array<i32>} : memref<8x384xf32, #tpu.memory_space<vmem>>, vector<8x128xf32>,
    return
  }
  func.func @transform_0(%arg0: i32) -> (i32, i32) {
    %c0_i32 = arith.constant 0 : i32
    %c0_i32_0 = arith.constant 0 : i32
    return %arg0, %c0_i32 : i32, i32
  }
  func.func @transform_1(%arg0: i32) -> (i32, i32) {
    %c0_i32 = arith.constant 0 : i32
    %c0_i32_0 = arith.constant 0 : i32
    return %arg0, %c0_i32 : i32, i32
  }
  func.func @transform_2(%arg0: i32) -> (i32, i32) {
    %c0_i32 = arith.constant 0 : i32
    %c0_i32_0 = arith.constant 0 : i32
    %c0_i32_1 = arith.constant 0 : i32
    return %c0_i32, %c0_i32_0 : i32, i32
  }
  func.func @transform_3(%arg0: i32) -> (i32, i32) {
    %c0_i32 = arith.constant 0 : i32
    %c0_i32_0 = arith.constant 0 : i32
    %c0_i32_1 = arith.constant 0 : i32
    return %c0_i32, %c0_i32_0 : i32, i32
  }
  func.func @transform_4(%arg0: i32) -> (i32, i32) {
    %c0_i32 = arith.constant 0 : i32
    %c0_i32_0 = arith.constant 0 : i32
    %c0_i32_1 = arith.constant 0 : i32
    return %c0_i32, %c0_i32_0 : i32, i32
  }
  func.func @transform_5(%arg0: i32) -> (i32, i32) {
    %c0_i32 = arith.constant 0 : i32
    %c0_i32_0 = arith.constant 0 : i32
    %c0_i32_1 = arith.constant 0 : i32
    return %c0_i32, %c0_i32_0 : i32, i32
  }
  func.func @transform_6(%arg0: i32) -> (i32, i32) {
    %c0_i32 = arith.constant 0 : i32
    %c0_i32_0 = arith.constant 0 : i32
    %c0_i32_1 = arith.constant 0 : i32
    return %c0_i32, %c0_i32_0 : i32, i32
  }
  func.func @transform_7(%arg0: i32) -> (i32, i32) {
    %c0_i32 = arith.constant 0 : i32
    %c0_i32_0 = arith.constant 0 : i32
    %c0_i32_1 = arith.constant 0 : i32
    return %c0_i32, %c0_i32_0 : i32, i32
  }
  func.func @transform_8(%arg0: i32) -> (i32, i32) {
    %c0_i32 = arith.constant 0 : i32
    %c0_i32_0 = arith.constant 0 : i32
    %c0_i32_1 = arith.constant 0 : i32
    return %c0_i32, %c0_i32_0 : i32, i32
  }
  func.func @transform_9(%arg0: i32) -> (i32, i32) {
    %c0_i32 = arith.constant 0 : i32
    %c0_i32_0 = arith.constant 0 : i32
    %c0_i32_1 = arith.constant 0 : i32
    return %c0_i32, %c0_i32_0 : i32, i32
  }
  func.func @transform_10(%arg0: i32) -> (i32, i32) {
    %c0_i32 = arith.constant 0 : i32
    %c0_i32_0 = arith.constant 0 : i32
    return %arg0, %c0_i32 : i32, i32
  }
}

</mosaic_0001>

<llo_original>
// kernel: tpu_custom_call.1
$region0: #{tpu_custom_call.1}
  #allocation0 [shape = 'u32[]', space=smem, size = 0x4, offset = 0x4, fixed_abs, tag = 'smem constant byte address 0x4 - core index']
  #allocation1 [shape = 'u32[144,128]{1,0:T(1,128)}', space=vmem, size = 0x12000, scoped, tag = 'internal scratch']
  %s0 = inlined_call_operand.hbm [shape: bf16[8,128], index: 0, kind: input, shape index: {}]
  %s1 = inlined_call_operand.hbm [shape: f32[8,128], index: 1, kind: input, shape index: {}]
  %s2 = inlined_call_operand.hbm [shape: bf16[128,128], index: 2, kind: input, shape index: {}]
  %s3 = inlined_call_operand.vmem [shape: f32[1,128], index: 3, kind: input, shape index: {}]
  %s4 = inlined_call_operand.hbm [shape: bf16[128,128], index: 4, kind: input, shape index: {}]
  %s5 = inlined_call_operand.vmem [shape: f32[1,128], index: 5, kind: input, shape index: {}]
  %s6 = inlined_call_operand.hbm [shape: bf16[128,128], index: 6, kind: input, shape index: {}]
  %s7 = inlined_call_operand.vmem [shape: f32[1,128], index: 7, kind: input, shape index: {}]
  %s8 = inlined_call_operand.hbm [shape: bf16[128,256], index: 8, kind: input, shape index: {}]
  %s9 = inlined_call_operand.vmem [shape: f32[1,256], index: 9, kind: input, shape index: {}]
  %s10 = inlined_call_operand.hbm [shape: f32[8,384], index: 10, kind: output, shape index: {}]
  %s11 = sld [smem:[#allocation0]]
  $region74: #{tpu_custom_call.1} parent=0
    _
  %s13 = ssub.s32 1, %s11
  %s14 = scalar_select 0, %s13, %s11
  $region1: #{tpu_custom_call.1} parent=0
    #allocation2 [shape = 'u8[2048]{0}', space=vmem, size = 0x800, scoped, tag = 'input window, operand 0, single buffered']
    #allocation3 [shape = 's32[1]{0}', space=sflag, size = 0x4, scoped, tag = 'scoped memory for tpu_custom_call.1']
    #allocation4 [shape = 's32[1]{0}', space=sflag, size = 0x4, scoped, tag = 'scoped memory for tpu_custom_call.1']
    #allocation5 [shape = 'u8[4096]{0}', space=vmem, size = 0x1000, scoped, tag = 'input window, operand 1, single buffered']
    #allocation6 [shape = 's32[1]{0}', space=sflag, size = 0x4, scoped, tag = 'scoped memory for tpu_custom_call.1']
    #allocation7 [shape = 'u8[32768]{0}', space=vmem, size = 0x8000, scoped, tag = 'input window, operand 2, single buffered']
    #allocation8 [shape = 'u8[32768]{0}', space=vmem, size = 0x8000, scoped, tag = 'input window, operand 4, single buffered']
    #allocation9 [shape = 's32[1]{0}', space=sflag, size = 0x4, scoped, tag = 'scoped memory for tpu_custom_call.1']
    #allocation10 [shape = 'u8[32768]{0}', space=vmem, size = 0x8000, scoped, tag = 'input window, operand 6, single buffered']
    #allocation11 [shape = 'u8[65536]{0}', space=vmem, size = 0x10000, scoped, tag = 'input window, operand 8, single buffered']
    #allocation12 [shape = 's32[1]{0}', space=sflag, size = 0x4, scoped, tag = 'scoped memory for tpu_custom_call.1']
    #allocation13 [shape = 'u8[12288]{0}', space=vmem, size = 0x3000, scoped, tag = 'output window, operand 0, single buffered']
    %15 = vsyncpa [#allocation3], 0
    %16 = vsyncpa [#allocation6], 0
    %17 = vsyncpa [#allocation9], 0
    %18 = vsyncpa [#allocation12], 0
    %19 = vsyncpa [#allocation4], 0
    // Predicated region
    $region2: #{tpu_custom_call.1} parent=1 // pred_check
      _
    $region3: #{tpu_custom_call.1} parent=1 // pred_check_branch
      %21 = sbr.rel (0) target = $region5
    $region4: #{tpu_custom_call.1} parent=1 // pred_region
      %s23 = ssub.s32 64, 64
      %24 = vsyncadd [#allocation3], %s23
      %s26 = sshll.u32 [#allocation2], 4
      %s27 = int_to_ptr.vmem [resolvable:$true] %s26
      %29 = dma.hbm_to_vmem [thread:$0]  %s0, 64, %s27, [#allocation3]
    $region5: #{tpu_custom_call.1} parent=1 // pred_fallthru
      _
    // Predicated region
    $region6: #{tpu_custom_call.1} parent=1 // pred_check
      _
    $region7: #{tpu_custom_call.1} parent=1 // pred_check_branch
      %31 = sbr.rel (0) target = $region9
    $region8: #{tpu_custom_call.1} parent=1 // pred_region
      %s33 = ssub.s32 128, 128
      %34 = vsyncadd [#allocation6], %s33
      %s36 = sshll.u32 [#allocation5], 4
      %s37 = int_to_ptr.vmem [resolvable:$true] %s36
      %39 = dma.hbm_to_vmem [thread:$0]  %s1, 128, %s37, [#allocation6]
    $region9: #{tpu_custom_call.1} parent=1 // pred_fallthru
      _
    // Predicated region
    $region10: #{tpu_custom_call.1} parent=1 // pred_check
      _
    $region11: #{tpu_custom_call.1} parent=1 // pred_check_branch
      %41 = sbr.rel (0) target = $region13
    $region12: #{tpu_custom_call.1} parent=1 // pred_region
      %s43 = ssub.s32 1024, 1024
      %44 = vsyncadd [#allocation6], %s43
      %s45 = sshll.u32 [#allocation7], 4
      %s46 = int_to_ptr.vmem [resolvable:$true] %s45
      %51 = dma.hbm_to_vmem [thread:$0]  %s2, 1024, %s46, [#allocation6], 64, 64, 4
    $region13: #{tpu_custom_call.1} parent=1 // pred_fallthru
      _
    // Predicated region
    $region14: #{tpu_custom_call.1} parent=1 // pred_check
      _
    $region15: #{tpu_custom_call.1} parent=1 // pred_check_branch
      %53 = sbr.rel (0) target = $region17
    $region16: #{tpu_custom_call.1} parent=1 // pred_region
      _
    $region17: #{tpu_custom_call.1} parent=1 // pred_fallthru
      _
    // Predicated region
    $region18: #{tpu_custom_call.1} parent=1 // pred_check
      _
    $region19: #{tpu_custom_call.1} parent=1 // pred_check_branch
      %55 = sbr.rel (0) target = $region21
    $region20: #{tpu_custom_call.1} parent=1 // pred_region
      %s57 = ssub.s32 1024, 1024
      %58 = vsyncadd [#allocation9], %s57
      %s59 = sshll.u32 [#allocation8], 4
      %s60 = int_to_ptr.vmem [resolvable:$true] %s59
      %65 = dma.hbm_to_vmem [thread:$0]  %s4, 1024, %s60, [#allocation9], 64, 64, 4
    $region21: #{tpu_custom_call.1} parent=1 // pred_fallthru
      _
    // Predicated region
    $region22: #{tpu_custom_call.1} parent=1 // pred_check
      _
    $region23: #{tpu_custom_call.1} parent=1 // pred_check_branch
      %67 = sbr.rel (0) target = $region25
    $region24: #{tpu_custom_call.1} parent=1 // pred_region
      _
    $region25: #{tpu_custom_call.1} parent=1 // pred_fallthru
      _
    // Predicated region
    $region26: #{tpu_custom_call.1} parent=1 // pred_check
      _
    $region27: #{tpu_custom_call.1} parent=1 // pred_check_branch
      %69 = sbr.rel (0) target = $region29
    $region28: #{tpu_custom_call.1} parent=1 // pred_region
      %s71 = ssub.s32 1024, 1024
      %72 = vsyncadd [#allocation9], %s71
      %s73 = sshll.u32 [#allocation10], 4
      %s74 = int_to_ptr.vmem [resolvable:$true] %s73
      %79 = dma.hbm_to_vmem [thread:$0]  %s6, 1024, %s74, [#allocation9], 64, 64, 4
    $region29: #{tpu_custom_call.1} parent=1 // pred_fallthru
      _
    // Predicated region
    $region30: #{tpu_custom_call.1} parent=1 // pred_check
      _
    $region31: #{tpu_custom_call.1} parent=1 // pred_check_branch
      %81 = sbr.rel (0) target = $region33
    $region32: #{tpu_custom_call.1} parent=1 // pred_region
      _
    $region33: #{tpu_custom_call.1} parent=1 // pred_fallthru
      _
    // Predicated region
    $region34: #{tpu_custom_call.1} parent=1 // pred_check
      _
    $region35: #{tpu_custom_call.1} parent=1 // pred_check_branch
      %83 = sbr.rel (0) target = $region37
    $region36: #{tpu_custom_call.1} parent=1 // pred_region
      %s85 = ssub.s32 2048, 2048
      %86 = vsyncadd [#allocation12], %s85
      %s87 = sshll.u32 [#allocation11], 4
      %s88 = int_to_ptr.vmem [resolvable:$true] %s87
      %93 = dma.hbm_to_vmem [thread:$0]  %s8, 2048, %s88, [#allocation12], 128, 128, 8
    $region37: #{tpu_custom_call.1} parent=1 // pred_fallthru
      _
    // Predicated region
    $region38: #{tpu_custom_call.1} parent=1 // pred_check
      _
    $region39: #{tpu_custom_call.1} parent=1 // pred_check_branch
      %95 = sbr.rel (0) target = $region41
    $region40: #{tpu_custom_call.1} parent=1 // pred_region
      _
    $region41: #{tpu_custom_call.1} parent=1 // pred_fallthru
      _
    // Predicated region
    $region42: #{tpu_custom_call.1} parent=1 // pred_check
      _
    $region43: #{tpu_custom_call.1} parent=1 // pred_check_branch
      %97 = sbr.rel (0) target = $region45
    $region44: #{tpu_custom_call.1} parent=1 // pred_region
      %98 = dma.done [#allocation3], 64
    $region45: #{tpu_custom_call.1} parent=1 // pred_fallthru
      _
    // Predicated region
    $region46: #{tpu_custom_call.1} parent=1 // pred_check
      _
    $region47: #{tpu_custom_call.1} parent=1 // pred_check_branch
      %100 = sbr.rel (0) target = $region49
    $region48: #{tpu_custom_call.1} parent=1 // pred_region
      %101 = dma.done [#allocation6], 128
    $region49: #{tpu_custom_call.1} parent=1 // pred_fallthru
      _
    // Predicated region
    $region50: #{tpu_custom_call.1} parent=1 // pred_check
      _
    $region51: #{tpu_custom_call.1} parent=1 // pred_check_branch
      %103 = sbr.rel (0) target = $region53
    $region52: #{tpu_custom_call.1} parent=1 // pred_region
      %104 = dma.done [#allocation6], 1024
    $region53: #{tpu_custom_call.1} parent=1 // pred_fallthru
      _
    // Predicated region
    $region54: #{tpu_custom_call.1} parent=1 // pred_check
      _
    $region55: #{tpu_custom_call.1} parent=1 // pred_check_branch
      %106 = sbr.rel (0) target = $region57
    $region56: #{tpu_custom_call.1} parent=1 // pred_region
      %107 = dma.done [#allocation9], 1024
    $region57: #{tpu_custom_call.1} parent=1 // pred_fallthru
      _
    // Predicated region
    $region58: #{tpu_custom_call.1} parent=1 // pred_check
      _
    $region59: #{tpu_custom_call.1} parent=1 // pred_check_branch
      %109 = sbr.rel (0) target = $region61
    $region60: #{tpu_custom_call.1} parent=1 // pred_region
      %110 = dma.done [#allocation9], 1024
    $region61: #{tpu_custom_call.1} parent=1 // pred_fallthru
      _
    // Predicated region
    $region62: #{tpu_custom_call.1} parent=1 // pred_check
      _
    $region63: #{tpu_custom_call.1} parent=1 // pred_check_branch
      %112 = sbr.rel (0) target = $region65
    $region64: #{tpu_custom_call.1} parent=1 // pred_region
      %113 = dma.done [#allocation12], 2048
    $region65: #{tpu_custom_call.1} parent=1 // pred_fallthru
      _
    %v115 = vlaneseq
    %v116 = vand.u32 %v115, 127
    %vm117 = vcmp.lt.s32.totalorder %v116, 32
    %v118 = vld [vmem:[#allocation2] sm:$0xf]
    %v119 = vld [vmem:[#allocation7] sm:$0xf]
    %v120 = vld [vmem:[#allocation7 + $0x4] sm:$0xf]
    %v121 = vld [vmem:[#allocation7 + $0x8] sm:$0xf]
    %v122 = vld [vmem:[#allocation7 + $0xc] sm:$0xf]
    %v123 = vld [vmem:[#allocation7 + $0x10] sm:$0xf]
    %v124 = vld [vmem:[#allocation7 + $0x14] sm:$0xf]
    %v125 = vld [vmem:[#allocation7 + $0x18] sm:$0xf]
    %v126 = vld [vmem:[#allocation7 + $0x1c] sm:$0xf]
    %v127 = vld [vmem:[#allocation7 + $0x20] sm:$0xf]
    %v128 = vld [vmem:[#allocation7 + $0x24] sm:$0xf]
    %v129 = vld [vmem:[#allocation7 + $0x28] sm:$0xf]
    %v130 = vld [vmem:[#allocation7 + $0x2c] sm:$0xf]
    %v131 = vld [vmem:[#allocation7 + $0x30] sm:$0xf]
    %v132 = vld [vmem:[#allocation7 + $0x34] sm:$0xf]
    %v133 = vld [vmem:[#allocation7 + $0x38] sm:$0xf]
    %v134 = vld [vmem:[#allocation7 + $0x3c] sm:$0xf]
    %v135 = vld [vmem:[%s3] sm:$0x1]
    %v137 = vlaneseq
    %v138 = vshrl.u32 %v137, 7
    %v139 = vsub.s32 0, %v138
    %v140 = vrot.slane %v135, %v139
    %v158 = vunpack.c.l.b16 %v119
    %v159 = vunpack.c.l.b16 %v120
    %v160 = vunpack.c.l.b16 %v121
    %v161 = vunpack.c.l.b16 %v122
    %v162 = vunpack.c.l.b16 %v123
    %v163 = vunpack.c.l.b16 %v124
    %v164 = vunpack.c.l.b16 %v125
    %v165 = vunpack.c.l.b16 %v126
    %v166 = vunpack.c.l.b16 %v127
    %v167 = vunpack.c.l.b16 %v128
    %v168 = vunpack.c.l.b16 %v129
    %v169 = vunpack.c.l.b16 %v130
    %v170 = vunpack.c.l.b16 %v131
    %v171 = vunpack.c.l.b16 %v132
    %v172 = vunpack.c.l.b16 %v133
    %v173 = vunpack.c.l.b16 %v134
    %v174 = vpack.c.b16 %v159, %v158
    %v175 = vpack.c.b16 %v161, %v160
    %v176 = vpack.c.b16 %v163, %v162
    %v177 = vpack.c.b16 %v165, %v164
    %v178 = vpack.c.b16 %v167, %v166
    %v179 = vpack.c.b16 %v169, %v168
    %v180 = vpack.c.b16 %v171, %v170
    %v181 = vpack.c.b16 %v173, %v172
    %190 = vmatprep.subr.bf16.mxu0 0
    %191 = vmatpush1.bf16.msra.mxu0 %v181
    %192 = vmatprep.subr.bf16.mxu0 0
    %193 = vmatpush1.bf16.msra.mxu0 %v180
    %194 = vmatprep.subr.bf16.mxu0 0
    %195 = vmatpush1.bf16.msra.mxu0 %v179
    %196 = vmatprep.subr.bf16.mxu0 0
    %197 = vmatpush1.bf16.msra.mxu0 %v178
    %198 = vmatprep.subr.bf16.mxu0 0
    %199 = vmatpush1.bf16.msra.mxu0 %v177
    %200 = vmatprep.subr.bf16.mxu0 0
    %201 = vmatpush1.bf16.msra.mxu0 %v176
    %202 = vmatprep.subr.bf16.mxu0 0
    %203 = vmatpush1.bf16.msra.mxu0 %v175
    %204 = vmatprep.subr.bf16.mxu0 0
    %205 = vmatpush1.bf16.msra.mxu0 %v174
    %206 = vmatprep.subr.bf16.mxu0 0
    %207 = vmatpush2.bf16.msra.mxu0 0
    %208 = vmatprep.subr.bf16.mxu0 0
    %209 = vmatpush2.bf16.msra.mxu0 0
    %210 = vmatprep.subr.bf16.mxu0 0
    %211 = vmatpush2.bf16.msra.mxu0 0
    %212 = vmatprep.subr.bf16.mxu0 0
    %213 = vmatpush2.bf16.msra.mxu0 0
    %214 = vmatprep.subr.bf16.mxu0 0
    %215 = vmatpush2.bf16.msra.mxu0 0
    %216 = vmatprep.subr.bf16.mxu0 0
    %217 = vmatpush2.bf16.msra.mxu0 0
    %218 = vmatprep.subr.bf16.mxu0 0
    %219 = vmatpush2.bf16.msra.mxu0 0
    %220 = vmatprep.subr.bf16.mxu0 0
    %221 = vmatpush2.bf16.msra.mxu0 0
    %222 = vmatprep.mubr.bf16.mxu0 0
    %223 = vmatmul.mubr.bf16.gmra.mxu0 %v118
    %v224 = vpop.f32.mrf.mxu0
    %v225 = vadd.f32 %v140, %v224
    %v226 = vpop.f32.mrf.mxu0
    %v227 = vpop.f32.mrf.mxu0
    %v228 = vpop.f32.mrf.mxu0
    %229 = vdwg.mxu0
    %230 = vadd.xlane.f32.xlu0 %v225
    %v231 = vpop.xlane.xlu0 %230
    %v232 = vmul.f32 %v231, 0.03125
    %v233 = vsub.f32 %v225, %v232
    %v234 = vsel %vm117, 1, 0
    %vm235 = vcmp.eq.s32.totalorder %v234, 1
    %v236 = vsel %vm235, %v233, 0.0
    %v237 = vmul.f32 %v236, %v236
    %238 = vadd.xlane.f32.xlu0 %v237
    %v239 = vpop.xlane.xlu0 %238
    %v240 = vmul.f32 %v239, 0.03125
    %v241 = vadd.f32 %v240, 1e-05
    %v242 = vrsqrt.pop %v241
    %v243 = vmul.f32 %v236, %v242
    %v244 = vmul.f32 %v243, 0.5
    %v245 = vmul.f32 %v243, 0.044715
    %v246 = vmul.f32 %v245, %v243
    %v247 = vmul.f32 %v246, %v243
    %v248 = vadd.f32 %v243, %v247
    %v249 = vmul.f32 %v248, 0.7978846
    %v250 = vtanh.pop %v249
    %v251 = vadd.f32 %v250, 1.0
    %v252 = vmul.f32 %v244, %v251
    %v253 = vld [vmem:[#allocation8] sm:$0xf]
    %v254 = vld [vmem:[#allocation8 + $0x4] sm:$0xf]
    %v255 = vld [vmem:[#allocation8 + $0x8] sm:$0xf]
    %v256 = vld [vmem:[#allocation8 + $0xc] sm:$0xf]
    %v257 = vld [vmem:[#allocation8 + $0x10] sm:$0xf]
    %v258 = vld [vmem:[#allocation8 + $0x14] sm:$0xf]
    %v259 = vld [vmem:[#allocation8 + $0x18] sm:$0xf]
    %v260 = vld [vmem:[#allocation8 + $0x1c] sm:$0xf]
    %v261 = vld [vmem:[#allocation8 + $0x20] sm:$0xf]
    %v262 = vld [vmem:[#allocation8 + $0x24] sm:$0xf]
    %v263 = vld [vmem:[#allocation8 + $0x28] sm:$0xf]
    %v264 = vld [vmem:[#allocation8 + $0x2c] sm:$0xf]
    %v265 = vld [vmem:[#allocation8 + $0x30] sm:$0xf]
    %v266 = vld [vmem:[#allocation8 + $0x34] sm:$0xf]
    %v267 = vld [vmem:[#allocation8 + $0x38] sm:$0xf]
    %v268 = vld [vmem:[#allocation8 + $0x3c] sm:$0xf]
    %v269 = vld [vmem:[%s5] sm:$0x1]
    %v270 = vpack.c.bf16 %v252, %v252
    %v272 = vlaneseq
    %v273 = vshrl.u32 %v272, 7
    %v274 = vsub.s32 0, %v273
    %v275 = vrot.slane %v269, %v274
    %v293 = vunpack.c.l.b16 %v253
    %v294 = vunpack.c.l.b16 %v254
    %v295 = vunpack.c.l.b16 %v255
    %v296 = vunpack.c.l.b16 %v256
    %v297 = vunpack.c.l.b16 %v257
    %v298 = vunpack.c.l.b16 %v258
    %v299 = vunpack.c.l.b16 %v259
    %v300 = vunpack.c.l.b16 %v260
    %v301 = vunpack.c.l.b16 %v261
    %v302 = vunpack.c.l.b16 %v262
    %v303 = vunpack.c.l.b16 %v263
    %v304 = vunpack.c.l.b16 %v264
    %v305 = vunpack.c.l.b16 %v265
    %v306 = vunpack.c.l.b16 %v266
    %v307 = vunpack.c.l.b16 %v267
    %v308 = vunpack.c.l.b16 %v268
    %v309 = vpack.c.b16 %v294, %v293
    %v310 = vpack.c.b16 %v296, %v295
    %v311 = vpack.c.b16 %v298, %v297
    %v312 = vpack.c.b16 %v300, %v299
    %v313 = vpack.c.b16 %v302, %v301
    %v314 = vpack.c.b16 %v304, %v303
    %v315 = vpack.c.b16 %v306, %v305
    %v316 = vpack.c.b16 %v308, %v307
    %325 = vmatprep.subr.bf16.mxu0 0
    %326 = vmatpush1.bf16.msra.mxu0 %v316
    %327 = vmatprep.subr.bf16.mxu0 0
    %328 = vmatpush1.bf16.msra.mxu0 %v315
    %329 = vmatprep.subr.bf16.mxu0 0
    %330 = vmatpush1.bf16.msra.mxu0 %v314
    %331 = vmatprep.subr.bf16.mxu0 0
    %332 = vmatpush1.bf16.msra.mxu0 %v313
    %333 = vmatprep.subr.bf16.mxu0 0
    %334 = vmatpush1.bf16.msra.mxu0 %v312
    %335 = vmatprep.subr.bf16.mxu0 0
    %336 = vmatpush1.bf16.msra.mxu0 %v311
    %337 = vmatprep.subr.bf16.mxu0 0
    %338 = vmatpush1.bf16.msra.mxu0 %v310
    %339 = vmatprep.subr.bf16.mxu0 0
    %340 = vmatpush1.bf16.msra.mxu0 %v309
    %341 = vmatprep.subr.bf16.mxu0 0
    %342 = vmatpush2.bf16.msra.mxu0 0
    %343 = vmatprep.subr.bf16.mxu0 0
    %344 = vmatpush2.bf16.msra.mxu0 0
    %345 = vmatprep.subr.bf16.mxu0 0
    %346 = vmatpush2.bf16.msra.mxu0 0
    %347 = vmatprep.subr.bf16.mxu0 0
    %348 = vmatpush2.bf16.msra.mxu0 0
    %349 = vmatprep.subr.bf16.mxu0 0
    %350 = vmatpush2.bf16.msra.mxu0 0
    %351 = vmatprep.subr.bf16.mxu0 0
    %352 = vmatpush2.bf16.msra.mxu0 0
    %353 = vmatprep.subr.bf16.mxu0 0
    %354 = vmatpush2.bf16.msra.mxu0 0
    %355 = vmatprep.subr.bf16.mxu0 0
    %356 = vmatpush2.bf16.msra.mxu0 0
    %357 = vmatprep.mubr.bf16.mxu0 0
    %358 = vmatmul.mubr.bf16.gmra.mxu0 %v270
    %v359 = vpop.f32.mrf.mxu0
    %v360 = vadd.f32 %v275, %v359
    %v361 = vpop.f32.mrf.mxu0
    %v362 = vpop.f32.mrf.mxu0
    %v363 = vpop.f32.mrf.mxu0
    %364 = vdwg.mxu0
    %365 = vadd.xlane.f32.xlu0 %v360
    %v366 = vpop.xlane.xlu0 %365
    %v367 = vmul.f32 %v366, 0.03125
    %v368 = vsub.f32 %v360, %v367
    %v369 = vsel %vm235, %v368, 0.0
    %v370 = vmul.f32 %v369, %v369
    %371 = vadd.xlane.f32.xlu0 %v370
    %v372 = vpop.xlane.xlu0 %371
    %v373 = vmul.f32 %v372, 0.03125
    %v374 = vadd.f32 %v373, 1e-05
    %v375 = vrsqrt.pop %v374
    %v376 = vmul.f32 %v369, %v375
    %v377 = vmul.f32 %v376, 0.5
    %v378 = vmul.f32 %v376, 0.044715
    %v379 = vmul.f32 %v378, %v376
    %v380 = vmul.f32 %v379, %v376
    %v381 = vadd.f32 %v376, %v380
    %v382 = vmul.f32 %v381, 0.7978846
    %v383 = vtanh.pop %v382
    %v384 = vadd.f32 %v383, 1.0
    %v385 = vmul.f32 %v377, %v384
    %v386 = vld [vmem:[#allocation10] sm:$0xf]
    %v387 = vld [vmem:[#allocation10 + $0x4] sm:$0xf]
    %v388 = vld [vmem:[#allocation10 + $0x8] sm:$0xf]
    %v389 = vld [vmem:[#allocation10 + $0xc] sm:$0xf]
    %v390 = vld [vmem:[#allocation10 + $0x10] sm:$0xf]
    %v391 = vld [vmem:[#allocation10 + $0x14] sm:$0xf]
    %v392 = vld [vmem:[#allocation10 + $0x18] sm:$0xf]
    %v393 = vld [vmem:[#allocation10 + $0x1c] sm:$0xf]
    %v394 = vld [vmem:[#allocation10 + $0x20] sm:$0xf]
    %v395 = vld [vmem:[#allocation10 + $0x24] sm:$0xf]
    %v396 = vld [vmem:[#allocation10 + $0x28] sm:$0xf]
    %v397 = vld [vmem:[#allocation10 + $0x2c] sm:$0xf]
    %v398 = vld [vmem:[#allocation10 + $0x30] sm:$0xf]
    %v399 = vld [vmem:[#allocation10 + $0x34] sm:$0xf]
    %v400 = vld [vmem:[#allocation10 + $0x38] sm:$0xf]
    %v401 = vld [vmem:[#allocation10 + $0x3c] sm:$0xf]
    %v402 = vld [vmem:[%s7] sm:$0x1]
    %v403 = vpack.c.bf16 %v385, %v385
    %v405 = vlaneseq
    %v406 = vshrl.u32 %v405, 7
    %v407 = vsub.s32 0, %v406
    %v408 = vrot.slane %v402, %v407
    %v426 = vunpack.c.l.b16 %v386
    %v427 = vunpack.c.l.b16 %v387
    %v428 = vunpack.c.l.b16 %v388
    %v429 = vunpack.c.l.b16 %v389
    %v430 = vunpack.c.l.b16 %v390
    %v431 = vunpack.c.l.b16 %v391
    %v432 = vunpack.c.l.b16 %v392
    %v433 = vunpack.c.l.b16 %v393
    %v434 = vunpack.c.l.b16 %v394
    %v435 = vunpack.c.l.b16 %v395
    %v436 = vunpack.c.l.b16 %v396
    %v437 = vunpack.c.l.b16 %v397
    %v438 = vunpack.c.l.b16 %v398
    %v439 = vunpack.c.l.b16 %v399
    %v440 = vunpack.c.l.b16 %v400
    %v441 = vunpack.c.l.b16 %v401
    %v442 = vpack.c.b16 %v427, %v426
    %v443 = vpack.c.b16 %v429, %v428
    %v444 = vpack.c.b16 %v431, %v430
    %v445 = vpack.c.b16 %v433, %v432
    %v446 = vpack.c.b16 %v435, %v434
    %v447 = vpack.c.b16 %v437, %v436
    %v448 = vpack.c.b16 %v439, %v438
    %v449 = vpack.c.b16 %v441, %v440
    %458 = vmatprep.subr.bf16.mxu0 0
    %459 = vmatpush1.bf16.msra.mxu0 %v449
    %460 = vmatprep.subr.bf16.mxu0 0
    %461 = vmatpush1.bf16.msra.mxu0 %v448
    %462 = vmatprep.subr.bf16.mxu0 0
    %463 = vmatpush1.bf16.msra.mxu0 %v447
    %464 = vmatprep.subr.bf16.mxu0 0
    %465 = vmatpush1.bf16.msra.mxu0 %v446
    %466 = vmatprep.subr.bf16.mxu0 0
    %467 = vmatpush1.bf16.msra.mxu0 %v445
    %468 = vmatprep.subr.bf16.mxu0 0
    %469 = vmatpush1.bf16.msra.mxu0 %v444
    %470 = vmatprep.subr.bf16.mxu0 0
    %471 = vmatpush1.bf16.msra.mxu0 %v443
    %472 = vmatprep.subr.bf16.mxu0 0
    %473 = vmatpush1.bf16.msra.mxu0 %v442
    %474 = vmatprep.subr.bf16.mxu0 0
    %475 = vmatpush2.bf16.msra.mxu0 0
    %476 = vmatprep.subr.bf16.mxu0 0
    %477 = vmatpush2.bf16.msra.mxu0 0
    %478 = vmatprep.subr.bf16.mxu0 0
    %479 = vmatpush2.bf16.msra.mxu0 0
    %480 = vmatprep.subr.bf16.mxu0 0
    %481 = vmatpush2.bf16.msra.mxu0 0
    %482 = vmatprep.subr.bf16.mxu0 0
    %483 = vmatpush2.bf16.msra.mxu0 0
    %484 = vmatprep.subr.bf16.mxu0 0
    %485 = vmatpush2.bf16.msra.mxu0 0
    %486 = vmatprep.subr.bf16.mxu0 0
    %487 = vmatpush2.bf16.msra.mxu0 0
    %488 = vmatprep.subr.bf16.mxu0 0
    %489 = vmatpush2.bf16.msra.mxu0 0
    %490 = vmatprep.mubr.bf16.mxu0 0
    %491 = vmatmul.mubr.bf16.gmra.mxu0 %v403
    %v492 = vpop.f32.mrf.mxu0
    %v493 = vadd.f32 %v408, %v492
    %v494 = vpop.f32.mrf.mxu0
    %v495 = vpop.f32.mrf.mxu0
    %v496 = vpop.f32.mrf.mxu0
    %497 = vdwg.mxu0
    %498 = vadd.xlane.f32.xlu0 %v493
    %v499 = vpop.xlane.xlu0 %498
    %v500 = vmul.f32 %v499, 0.03125
    %v501 = vsub.f32 %v493, %v500
    %v502 = vsel %vm235, %v501, 0.0
    %v503 = vmul.f32 %v502, %v502
    %504 = vadd.xlane.f32.xlu0 %v503
    %v505 = vpop.xlane.xlu0 %504
    %v506 = vmul.f32 %v505, 0.03125
    %v507 = vadd.f32 %v506, 1e-05
    %v508 = vrsqrt.pop %v507
    %v509 = vmul.f32 %v502, %v508
    %v510 = vmul.f32 %v509, 0.5
    %v511 = vmul.f32 %v509, 0.044715
    %v512 = vmul.f32 %v511, %v509
    %v513 = vmul.f32 %v512, %v509
    %v514 = vadd.f32 %v509, %v513
    %v515 = vmul.f32 %v514, 0.7978846
    %v516 = vtanh.pop %v515
    %v517 = vadd.f32 %v516, 1.0
    %v518 = vmul.f32 %v510, %v517
    %v519 = vld [vmem:[#allocation11] sm:$0xff]
    %v520 = vld [vmem:[#allocation11 + $0x8] sm:$0xff]
    %v521 = vld [vmem:[#allocation11 + $0x10] sm:$0xff]
    %v522 = vld [vmem:[#allocation11 + $0x18] sm:$0xff]
    %v523 = vld [vmem:[#allocation11 + $0x20] sm:$0xff]
    %v524 = vld [vmem:[#allocation11 + $0x28] sm:$0xff]
    %v525 = vld [vmem:[#allocation11 + $0x30] sm:$0xff]
    %v526 = vld [vmem:[#allocation11 + $0x38] sm:$0xff]
    %v527 = vld [vmem:[#allocation11 + $0x40] sm:$0xff]
    %v528 = vld [vmem:[#allocation11 + $0x48] sm:$0xff]
    %v529 = vld [vmem:[#allocation11 + $0x50] sm:$0xff]
    %v530 = vld [vmem:[#allocation11 + $0x58] sm:$0xff]
    %v531 = vld [vmem:[#allocation11 + $0x60] sm:$0xff]
    %v532 = vld [vmem:[#allocation11 + $0x68] sm:$0xff]
    %v533 = vld [vmem:[#allocation11 + $0x70] sm:$0xff]
    %v534 = vld [vmem:[#allocation11 + $0x78] sm:$0xff]
    %v535 = vld [vmem:[%s9] sm:$0x3]
    %v536 = vpack.c.bf16 %v518, %v518
    %v538 = vlaneseq
    %v539 = vshrl.u32 %v538, 7
    %v540 = vsub.s32 0, %v539
    %v541 = vrot.slane %v535, %v540
    %v542 = vlaneseq
    %v543 = vshrl.u32 %v542, 7
    %v544 = vsub.s32 1, %v543
    %v545 = vrot.slane %v535, %v544
    %v564 = vunpack.c.l.b16 %v519
    %v565 = vunpack.c.h.b16 %v519
    %v566 = vunpack.c.l.b16 %v520
    %v567 = vunpack.c.h.b16 %v520
    %v568 = vunpack.c.l.b16 %v521
    %v569 = vunpack.c.h.b16 %v521
    %v570 = vunpack.c.l.b16 %v522
    %v571 = vunpack.c.h.b16 %v522
    %v572 = vunpack.c.l.b16 %v523
    %v573 = vunpack.c.h.b16 %v523
    %v574 = vunpack.c.l.b16 %v524
    %v575 = vunpack.c.h.b16 %v524
    %v576 = vunpack.c.l.b16 %v525
    %v577 = vunpack.c.h.b16 %v525
    %v578 = vunpack.c.l.b16 %v526
    %v579 = vunpack.c.h.b16 %v526
    %v580 = vunpack.c.l.b16 %v527
    %v581 = vunpack.c.h.b16 %v527
    %v582 = vunpack.c.l.b16 %v528
    %v583 = vunpack.c.h.b16 %v528
    %v584 = vunpack.c.l.b16 %v529
    %v585 = vunpack.c.h.b16 %v529
    %v586 = vunpack.c.l.b16 %v530
    %v587 = vunpack.c.h.b16 %v530
    %v588 = vunpack.c.l.b16 %v531
    %v589 = vunpack.c.h.b16 %v531
    %v590 = vunpack.c.l.b16 %v532
    %v591 = vunpack.c.h.b16 %v532
    %v592 = vunpack.c.l.b16 %v533
    %v593 = vunpack.c.h.b16 %v533
    %v594 = vunpack.c.l.b16 %v534
    %v595 = vunpack.c.h.b16 %v534
    %v596 = vpack.c.b16 %v566, %v564
    %v597 = vpack.c.b16 %v567, %v565
    %v598 = vpack.c.b16 %v570, %v568
    %v599 = vpack.c.b16 %v571, %v569
    %v600 = vpack.c.b16 %v574, %v572
    %v601 = vpack.c.b16 %v575, %v573
    %v602 = vpack.c.b16 %v578, %v576
    %v603 = vpack.c.b16 %v579, %v577
    %v604 = vpack.c.b16 %v582, %v580
    %v605 = vpack.c.b16 %v583, %v581
    %v606 = vpack.c.b16 %v586, %v584
    %v607 = vpack.c.b16 %v587, %v585
    %v608 = vpack.c.b16 %v590, %v588
    %v609 = vpack.c.b16 %v591, %v589
    %v610 = vpack.c.b16 %v594, %v592
    %v611 = vpack.c.b16 %v595, %v593
    %628 = vmatprep.subr.bf16.mxu0 %v611
    %629 = vmatpush1.bf16.msra.mxu0 %v610
    %630 = vmatprep.subr.bf16.mxu0 %v609
    %631 = vmatpush1.bf16.msra.mxu0 %v608
    %632 = vmatprep.subr.bf16.mxu0 %v607
    %633 = vmatpush1.bf16.msra.mxu0 %v606
    %634 = vmatprep.subr.bf16.mxu0 %v605
    %635 = vmatpush1.bf16.msra.mxu0 %v604
    %636 = vmatprep.subr.bf16.mxu0 %v603
    %637 = vmatpush1.bf16.msra.mxu0 %v602
    %638 = vmatprep.subr.bf16.mxu0 %v601
    %639 = vmatpush1.bf16.msra.mxu0 %v600
    %640 = vmatprep.subr.bf16.mxu0 %v599
    %641 = vmatpush1.bf16.msra.mxu0 %v598
    %642 = vmatprep.subr.bf16.mxu0 %v597
    %643 = vmatpush1.bf16.msra.mxu0 %v596
    %644 = vmatprep.subr.bf16.mxu0 0
    %645 = vmatpush2.bf16.msra.mxu0 0
    %646 = vmatprep.subr.bf16.mxu0 0
    %647 = vmatpush2.bf16.msra.mxu0 0
    %648 = vmatprep.subr.bf16.mxu0 0
    %649 = vmatpush2.bf16.msra.mxu0 0
    %650 = vmatprep.subr.bf16.mxu0 0
    %651 = vmatpush2.bf16.msra.mxu0 0
    %652 = vmatprep.subr.bf16.mxu0 0
    %653 = vmatpush2.bf16.msra.mxu0 0
    %654 = vmatprep.subr.bf16.mxu0 0
    %655 = vmatpush2.bf16.msra.mxu0 0
    %656 = vmatprep.subr.bf16.mxu0 0
    %657 = vmatpush2.bf16.msra.mxu0 0
    %658 = vmatprep.subr.bf16.mxu0 0
    %659 = vmatpush2.bf16.msra.mxu0 0
    %660 = vmatprep.mubr.bf16.mxu0 0
    %661 = vmatmul.mubr.bf16.gmra.mxu0 %v536
    %v662 = vpop.f32.mrf.mxu0
    %v663 = vadd.f32 %v541, %v662
    %v664 = vpop.f32.mrf.mxu0
    %v665 = vadd.f32 %v545, %v664
    %v666 = vpop.f32.mrf.mxu0
    %v667 = vpop.f32.mrf.mxu0
    %668 = vdwg.mxu0
    %v669 = vmax.f32 %v665, 0.0
    %vm670 = vcmp.ne.f32.partialorder %v665, %v665
    %v671 = vadd.f32 %v665, 0.0
    %v672 = vand.u32 2147483647, %v665
    %v673 = vsub.f32 0.0, %v672
    %v674 = vmul.f32 %v673, 1.442695
    %v675 = vpow.pop %v674
    %v676 = vadd.f32 %v675, 1.0
    %v677 = vlog2.pop %v676
    %v678 = vmul.f32 %v677, 0.6931472
    %v679 = vmul.f32 -0.5, %v675
    %v680 = vadd.f32 %v679, 1.0
    %v681 = vmul.f32 %v680, %v675
    %v682 = vand.u32 2147483647, %v675
    %vm683 = vcmp.lt.f32.partialorder %v682, 0.0004427343
    %v684 = vsel %vm683, %v681, %v678
    %v685 = vadd.f32 %v669, %v684
    %v686 = vsel %vm670, %v671, %v685
    %v687 = vld [vmem:[#allocation5] sm:$0xff]
    %v688 = vmul.f32 %v686, %v687
    %v689 = vadd.f32 %v663, %v688
    %690 = vst [vmem:[#allocation13] sm:$0xff] %v689
    %691 = vst [vmem:[#allocation13 + $0x8] sm:$0xff] %v663
    %692 = vst [vmem:[#allocation13 + $0x10] sm:$0xff] %v686
    // Predicated region
    $region66: #{tpu_custom_call.1} parent=1 // pred_check
      _
    $region67: #{tpu_custom_call.1} parent=1 // pred_check_branch
      %694 = sbr.rel (0) target = $region69
    $region68: #{tpu_custom_call.1} parent=1 // pred_region
      %s696 = ssub.s32 384, 384
      %697 = vsyncadd [#allocation4], %s696
      %s699 = sshll.u32 [#allocation13], 4
      %s700 = int_to_ptr.vmem [resolvable:$true] %s699
      %702 = dma.vmem_to_hbm [thread:$0]  %s700, 384, %s10, [#allocation4]
    $region69: #{tpu_custom_call.1} parent=1 // pred_fallthru
      _
    // Predicated region
    $region70: #{tpu_custom_call.1} parent=1 // pred_check
      _
    $region71: #{tpu_custom_call.1} parent=1 // pred_check_branch
      %704 = sbr.rel (0) target = $region73
    $region72: #{tpu_custom_call.1} parent=1 // pred_region
      %705 = dma.done [#allocation4], 384
    $region73: #{tpu_custom_call.1} parent=1 // pred_fallthru
      _
    %706 = vsyncpa [#allocation3], 1
    %707 = vsyncpa [#allocation6], 1
    %708 = vsyncpa [#allocation9], 1
    %709 = vsyncpa [#allocation12], 1
    %710 = vsyncpa [#allocation4], 1

</llo_original>
